<compile_context>
chip_gen: v7x
topology: tpu7x:2x2x1
jax: 0.10.0
libtpu: 0.0.40
codegen_flags: <defaults>
</compile_context>

<pallas_src>
import functools

import jax
import jax.numpy as jnp
from jax.experimental import pallas as pl
from jax.experimental.pallas import tpu as pltpu


def _round_up(v, m):
    return ((v + m - 1) // m) * m


def _policy_kernel(x_ref, w1_ref, b1_ref, wh_ref, bh_ref, out_ref, *, action_dim):
    # fc1 + ReLU (MXU matmul, f32 accumulate). Padded hidden lanes stay exactly 0 (zero W/b pad).
    h = jnp.dot(x_ref[...], w1_ref[...], preferred_element_type=jnp.float32)
    h = jnp.maximum(h + b1_ref[...], 0.0)          # b1 is (1, hidden_pad) -> broadcasts over rows

    # Fused heads: lanes [0, A) = mu, [A, 2A) = std-logits, rest = zero padding.
    z = jnp.dot(h, wh_ref[...], preferred_element_type=jnp.float32) + bh_ref[...]

    # softplus only on the std lanes (matches torch.nn.functional.softplus, beta=1, threshold=20)
    lane = jax.lax.broadcasted_iota(jnp.int32, z.shape, dimension=1)
    is_std = (lane >= action_dim) & (lane < 2 * action_dim)
    sp = jnp.where(z > 20.0, z, jnp.log1p(jnp.exp(jnp.minimum(z, 20.0))))
    out_ref[...] = jnp.where(is_std, sp, z).astype(out_ref.dtype)


def prepare_params(params):
    """One-time param prep (do NOT call per forward): fuse mu/std heads into one
    [hidden_pad, n_pad] weight with zero padding, and pad hidden_dim to a multiple of 128
    so the intermediate h is lane-dense. Padding is exact: padded hidden lanes of b1/w1 are
    zero (-> relu(0)=0) and padded rows of w_heads are zero (-> no output contribution)."""
    w1, b1 = params["w1"], params["b1"]
    state_dim, hidden_dim = w1.shape
    action_dim = params["w_mu"].shape[1]

    hidden_pad = _round_up(hidden_dim, 128)
    n_heads = 2 * action_dim
    n_pad = _round_up(max(n_heads, 128), 128)

    w1_p = jnp.pad(w1, ((0, 0), (0, hidden_pad - hidden_dim)))
    b1_p = jnp.pad(b1, ((0, 0), (0, hidden_pad - hidden_dim)))
    w_heads = jnp.pad(jnp.concatenate([params["w_mu"], params["w_std"]], axis=1),
                      ((0, hidden_pad - hidden_dim), (0, n_pad - n_heads)))
    b_heads = jnp.pad(jnp.concatenate([params["b_mu"], params["b_std"]], axis=1),
                      ((0, 0), (0, n_pad - n_heads)))
    return {"w1": w1_p, "b1": b1_p, "w_heads": w_heads, "b_heads": b_heads}


def _choose_tm(batch, block_rows):
    """Batch tile size.
    - Small batches: one block whose sublane dim equals the full batch (no 8-row rule).
    - Otherwise: at least two 8-row-aligned tiles so v7x's two TensorCores each get work
      (the batch grid axis is "parallel"); capped at block_rows. Any ragged final tile is
      padded/masked by Pallas -- no wrapper-side padding of x."""
    if batch < 16:
        return batch
    two_way = _round_up(pl.cdiv(_round_up(batch, 8), 2), 8)
    return max(8, min(block_rows, two_way))


def policy_net_continuous(x, prep, *, action_dim, block_rows=2048):
    """x: [B, state_dim] float32. prep: output of prepare_params. Returns (mu, std): [B, A]."""
    B, state_dim = x.shape
    hidden_pad = prep["w1"].shape[1]
    n_pad = prep["w_heads"].shape[1]

    tm = _choose_tm(B, block_rows)
    grid = (pl.cdiv(B, tm),)

    # ---- VMEM budget: double-buffered streamed x/out tiles + resident weights + h scratch ----
    f32 = 4
    block_bytes = f32 * (2 * tm * state_dim + 2 * tm * n_pad + tm * hidden_pad
                         + 2 * (state_dim * hidden_pad + hidden_pad
                                + hidden_pad * n_pad + n_pad))
    try:
        vmem_cap = int(pltpu.get_tpu_info().vmem_capacity_bytes)
    except Exception:                                  # query unsupported -> v7x-safe fallback
        vmem_cap = 64 << 20
    vmem_limit = int(min(vmem_cap - (8 << 20), max(16 << 20, 4 * block_bytes)))

    cost = pl.CostEstimate(
        flops=2 * B * hidden_pad * (state_dim + n_pad),
        transcendentals=2 * B * action_dim,            # exp + log1p on the std lanes
        bytes_accessed=f32 * (B * state_dim + state_dim * hidden_pad + hidden_pad
                              + hidden_pad * n_pad + n_pad + B * n_pad),
    )

    out = pl.pallas_call(
        functools.partial(_policy_kernel, action_dim=action_dim),
        out_shape=jax.ShapeDtypeStruct((B, n_pad), jnp.float32),
        grid=grid,
        in_specs=[
            pl.BlockSpec((tm, state_dim), lambda i: (i, 0)),          # streamed per batch tile
            pl.BlockSpec((state_dim, hidden_pad), lambda i: (0, 0)),  # resident weights
            pl.BlockSpec((1, hidden_pad), lambda i: (0, 0)),
            pl.BlockSpec((hidden_pad, n_pad), lambda i: (0, 0)),
            pl.BlockSpec((1, n_pad), lambda i: (0, 0)),
        ],
        out_specs=pl.BlockSpec((tm, n_pad), lambda i: (i, 0)),
        compiler_params=pltpu.CompilerParams(
            dimension_semantics=("parallel",),   # v7x: shard batch tiles across both TCs
            vmem_limit_bytes=vmem_limit,
        ),
        cost_estimate=cost,
    )(x, prep["w1"], prep["b1"], prep["w_heads"], prep["b_heads"])

    # Single pass over the lane-padded output slab, then split the small packed result.
    packed = out[:, :2 * action_dim]
    return packed[:, :action_dim], packed[:, action_dim:]


def init_params(key, state_dim, hidden_dim, action_dim):
    """Deterministic init mimicking torch.nn.Linear (uniform ±1/sqrt(fan_in)).
    Weights stored transposed ([in, out]); biases stored as (1, out)."""
    ks = jax.random.split(key, 6)

    def linear(kw, kb, fan_in, fan_out):
        bound = 1.0 / jnp.sqrt(jnp.float32(fan_in))
        w = jax.random.uniform(kw, (fan_in, fan_out), jnp.float32, -bound, bound)
        b = jax.random.uniform(kb, (1, fan_out), jnp.float32, -bound, bound)
        return w, b

    w1, b1 = linear(ks[0], ks[1], state_dim, hidden_dim)
    w_mu, b_mu = linear(ks[2], ks[3], hidden_dim, action_dim)
    w_std, b_std = linear(ks[4], ks[5], hidden_dim, action_dim)
    return {"w1": w1, "b1": b1, "w_mu": w_mu, "b_mu": b_mu,
            "w_std": w_std, "b_std": b_std}


def _reference(x, p):
    h = jnp.maximum(x @ p["w1"] + p["b1"], 0.0)
    mu = h @ p["w_mu"] + p["b_mu"]
    std = jax.nn.softplus(h @ p["w_std"] + p["b_std"])
    return mu, std


if __name__ == "__main__":
    state_dim, hidden_dim, action_dim = 16, 32, 4

    key = jax.random.PRNGKey(0)
    kx, kp, kx2, kx3 = jax.random.split(key, 4)
    params = init_params(kp, state_dim, hidden_dim, action_dim)
    prep = prepare_params(params)          # one-time fusion/padding, hoisted out of the jit path
    fwd = jax.jit(functools.partial(policy_net_continuous, action_dim=action_dim))

    def check(x):
        mu, std = fwd(x, prep)
        jax.block_until_ready((mu, std))
        mu_ref, std_ref = _reference(x, params)
        B = x.shape[0]
        assert mu.shape == (B, action_dim) and std.shape == (B, action_dim)
        assert jnp.allclose(mu, mu_ref, atol=1e-5, rtol=1e-5)
        assert jnp.allclose(std, std_ref, atol=1e-5, rtol=1e-5)
        assert bool(jnp.all(std > 0))

    # Small batch: single block, block == full batch dim.
    check(jax.random.normal(kx, (8, state_dim), jnp.float32))
    # Small batch not a multiple of 8: still one full-dim block (no padding anywhere).
    check(jax.random.normal(kx3, (6, state_dim), jnp.float32))
    # Mid-size batch: >= 2 tiles (both v7x TCs), ragged final tile masked by Pallas.
    check(jax.random.normal(kx2, (600, state_dim), jnp.float32))

    print("KERNEL_OK")
</pallas_src>

<mosaic_0001>
module attributes {stable_mosaic.version = 11 : i64} {
  func.func @_policy_kernel(%arg0: i32, %arg1: memref<8x16xf32, #tpu.memory_space<vmem>>, %arg2: memref<16x128xf32, #tpu.memory_space<vmem>>, %arg3: memref<1x128xf32, #tpu.memory_space<vmem>>, %arg4: memref<128x128xf32, #tpu.memory_space<vmem>>, %arg5: memref<1x128xf32, #tpu.memory_space<vmem>>, %arg6: memref<8x128xf32, #tpu.memory_space<vmem>>) attributes {dimension_semantics = [#tpu.dimension_semantics<parallel>], iteration_bounds = array<i64: 1>, scalar_prefetch = 0 : i64, scratch_operands = 0 : i64, tpu.core_type = #tpu.core_type<tc>, window_params = [{transform_indices = @transform_0, window_bounds = array<i64: 8, 16>}, {pipeline_mode = #tpu.pipeline_mode<synchronous>, transform_indices = @transform_1, window_bounds = array<i64: 16, 128>}, {pipeline_mode = #tpu.pipeline_mode<synchronous>, transform_indices = @transform_2, window_bounds = array<i64: 1, 128>}, {pipeline_mode = #tpu.pipeline_mode<synchronous>, transform_indices = @transform_3, window_bounds = array<i64: 128, 128>}, {pipeline_mode = #tpu.pipeline_mode<synchronous>, transform_indices = @transform_4, window_bounds = array<i64: 1, 128>}, {transform_indices = @transform_5, window_bounds = array<i64: 8, 128>}]} {
    %c0 = arith.constant 0 : index
    %c0_0 = arith.constant 0 : index
    %0 = vector.load %arg1[%c0, %c0_0] : memref<8x16xf32, #tpu.memory_space<vmem>>, vector<8x16xf32>
    %c0_1 = arith.constant 0 : index
    %c0_2 = arith.constant 0 : index
    %1 = vector.load %arg2[%c0_1, %c0_2] : memref<16x128xf32, #tpu.memory_space<vmem>>, vector<16x128xf32>
    %cst = arith.constant dense<0.000000e+00> : vector<8x128xf32>
    %2 = tpu.matmul %0, %1, %cst {dimension_numbers = #tpu.dot_dimension_numbers<[1], [0], [0], [1], [0, 0, 1, 1], [], []>} : vector<8x16xf32>, vector<16x128xf32>, vector<8x128xf32> -> vector<8x128xf32>
    %c0_3 = arith.constant 0 : index
    %c0_4 = arith.constant 0 : index
    %3 = vector.load %arg3[%c0_3, %c0_4] : memref<1x128xf32, #tpu.memory_space<vmem>>, vector<1x128xf32>
    %4 = vector.broadcast %3 : vector<1x128xf32> to vector<8x128xf32>
    %5 = arith.addf %2, %4 : vector<8x128xf32>
    %cst_5 = arith.constant 0.000000e+00 : f32
    %6 = vector.broadcast %cst_5 : f32 to vector<8x128xf32>
    %7 = arith.maximumf %5, %6 : vector<8x128xf32>
    %c0_6 = arith.constant 0 : index
    %c0_7 = arith.constant 0 : index
    %8 = vector.load %arg4[%c0_6, %c0_7] : memref<128x128xf32, #tpu.memory_space<vmem>>, vector<128x128xf32>
    %cst_8 = arith.constant dense<0.000000e+00> : vector<8x128xf32>
    %9 = tpu.matmul %7, %8, %cst_8 {dimension_numbers = #tpu.dot_dimension_numbers<[1], [0], [0], [1], [0, 0, 1, 1], [], []>} : vector<8x128xf32>, vector<128x128xf32>, vector<8x128xf32> -> vector<8x128xf32>
    %c0_9 = arith.constant 0 : index
    %c0_10 = arith.constant 0 : index
    %10 = vector.load %arg5[%c0_9, %c0_10] : memref<1x128xf32, #tpu.memory_space<vmem>>, vector<1x128xf32>
    %11 = vector.broadcast %10 : vector<1x128xf32> to vector<8x128xf32>
    %12 = arith.addf %9, %11 : vector<8x128xf32>
    %13 = tpu.iota {dimensions = array<i32: 1>} : vector<8x128xi32>
    %c4_i32 = arith.constant 4 : i32
    %14 = vector.broadcast %c4_i32 : i32 to vector<8x128xi32>
    %15 = arith.cmpi sge, %13, %14 : vector<8x128xi32>
    %c8_i32 = arith.constant 8 : i32
    %16 = vector.broadcast %c8_i32 : i32 to vector<8x128xi32>
    %17 = arith.cmpi slt, %13, %16 : vector<8x128xi32>
    %18 = arith.andi %15, %17 : vector<8x128xi1>
    %cst_11 = arith.constant 2.000000e+01 : f32
    %19 = vector.broadcast %cst_11 : f32 to vector<8x128xf32>
    %20 = arith.cmpf ogt, %12, %19 : vector<8x128xf32>
    %cst_12 = arith.constant 2.000000e+01 : f32
    %21 = vector.broadcast %cst_12 : f32 to vector<8x128xf32>
    %22 = arith.minimumf %12, %21 : vector<8x128xf32>
    %23 = math.exp %22 : vector<8x128xf32>
    %24 = math.log1p %23 : vector<8x128xf32>
    %25 = arith.select %20, %12, %24 : vector<8x128xi1>, vector<8x128xf32>
    %26 = arith.select %18, %25, %12 : vector<8x128xi1>, vector<8x128xf32>
    %c0_13 = arith.constant 0 : index
    %c0_14 = arith.constant 0 : index
    %27 = vector.load %arg6[%c0_13, %c0_14] : memref<8x128xf32, #tpu.memory_space<vmem>>, vector<8x128xf32>
    tpu.vector_store %arg6[%c0_13, %c0_14], %26 {strides = array<i32>} : memref<8x128xf32, #tpu.memory_space<vmem>>, vector<8x128xf32>,
    return
  }
  func.func @transform_0(%arg0: i32) -> (i32, i32) {
    %c0_i32 = arith.constant 0 : i32
    %c0_i32_0 = arith.constant 0 : i32
    return %arg0, %c0_i32 : i32, i32
  }
  func.func @transform_1(%arg0: i32) -> (i32, i32) {
    %c0_i32 = arith.constant 0 : i32
    %c0_i32_0 = arith.constant 0 : i32
    %c0_i32_1 = arith.constant 0 : i32
    return %c0_i32, %c0_i32_0 : i32, i32
  }
  func.func @transform_2(%arg0: i32) -> (i32, i32) {
    %c0_i32 = arith.constant 0 : i32
    %c0_i32_0 = arith.constant 0 : i32
    %c0_i32_1 = arith.constant 0 : i32
    return %c0_i32, %c0_i32_0 : i32, i32
  }
  func.func @transform_3(%arg0: i32) -> (i32, i32) {
    %c0_i32 = arith.constant 0 : i32
    %c0_i32_0 = arith.constant 0 : i32
    %c0_i32_1 = arith.constant 0 : i32
    return %c0_i32, %c0_i32_0 : i32, i32
  }
  func.func @transform_4(%arg0: i32) -> (i32, i32) {
    %c0_i32 = arith.constant 0 : i32
    %c0_i32_0 = arith.constant 0 : i32
    %c0_i32_1 = arith.constant 0 : i32
    return %c0_i32, %c0_i32_0 : i32, i32
  }
  func.func @transform_5(%arg0: i32) -> (i32, i32) {
    %c0_i32 = arith.constant 0 : i32
    %c0_i32_0 = arith.constant 0 : i32
    return %arg0, %c0_i32 : i32, i32
  }
}

</mosaic_0001>

<llo_original>
// kernel: policy_net_continuous.1
$region0: #{policy_net_continuous.1}
  #allocation0 [shape = 'u32[]', space=smem, size = 0x4, offset = 0x4, fixed_abs, tag = 'smem constant byte address 0x4 - core index']
  #allocation1 [shape = 'u32[144,128]{1,0:T(1,128)}', space=vmem, size = 0x12000, scoped, tag = 'internal scratch']
  %s0 = inlined_call_operand.hbm [shape: f32[8,16], index: 0, kind: input, shape index: {}]
  %s1 = inlined_call_operand.hbm [shape: f32[16,128], index: 1, kind: input, shape index: {}]
  %s2 = inlined_call_operand.vmem [shape: f32[1,128], index: 2, kind: input, shape index: {}]
  %s3 = inlined_call_operand.hbm [shape: f32[128,128], index: 3, kind: input, shape index: {}]
  %s4 = inlined_call_operand.vmem [shape: f32[1,128], index: 4, kind: input, shape index: {}]
  %s5 = inlined_call_operand.vmem [shape: f32[8,128], index: 5, kind: output, shape index: {}]
  %s6 = sld [smem:[#allocation0]]
  $region42: #{policy_net_continuous.1} parent=0
    _
  %s8 = ssub.s32 1, %s6
  %s9 = scalar_select 0, %s8, %s6
  $region1: #{policy_net_continuous.1} parent=0
    #allocation2 [shape = 'u8[4096]{0}', space=vmem, size = 0x1000, scoped, tag = 'input window, operand 0, single buffered']
    #allocation3 [shape = 's32[1]{0}', space=sflag, size = 0x4, scoped, tag = 'scoped memory for policy_net_continuous.1']
    #allocation4 [shape = 'u8[8192]{0}', space=vmem, size = 0x2000, scoped, tag = 'input window, operand 1, single buffered']
    #allocation5 [shape = 's32[1]{0}', space=sflag, size = 0x4, scoped, tag = 'scoped memory for policy_net_continuous.1']
    #allocation6 [shape = 'u8[65536]{0}', space=vmem, size = 0x10000, scoped, tag = 'input window, operand 3, single buffered']
    %10 = vsyncpa [#allocation3], 0
    %11 = vsyncpa [#allocation5], 0
    // Predicated region
    $region2: #{policy_net_continuous.1} parent=1 // pred_check
      _
    $region3: #{policy_net_continuous.1} parent=1 // pred_check_branch
      %13 = sbr.rel (0) target = $region5
    $region4: #{policy_net_continuous.1} parent=1 // pred_region
      %s15 = ssub.s32 128, 128
      %16 = vsyncadd [#allocation3], %s15
      %s18 = sshll.u32 [#allocation2], 4
      %s19 = int_to_ptr.vmem [resolvable:$true] %s18
      %21 = dma.hbm_to_vmem [thread:$0]  %s0, 128, %s19, [#allocation3]
    $region5: #{policy_net_continuous.1} parent=1 // pred_fallthru
      _
    // Predicated region
    $region6: #{policy_net_continuous.1} parent=1 // pred_check
      _
    $region7: #{policy_net_continuous.1} parent=1 // pred_check_branch
      %23 = sbr.rel (0) target = $region9
    $region8: #{policy_net_continuous.1} parent=1 // pred_region
      %s25 = ssub.s32 256, 256
      %26 = vsyncadd [#allocation5], %s25
      %s27 = sshll.u32 [#allocation4], 4
      %s28 = int_to_ptr.vmem [resolvable:$true] %s27
      %33 = dma.hbm_to_vmem [thread:$0]  %s1, 256, %s28, [#allocation5], 128, 128, 8
    $region9: #{policy_net_continuous.1} parent=1 // pred_fallthru
      _
    // Predicated region
    $region10: #{policy_net_continuous.1} parent=1 // pred_check
      _
    $region11: #{policy_net_continuous.1} parent=1 // pred_check_branch
      %35 = sbr.rel (0) target = $region13
    $region12: #{policy_net_continuous.1} parent=1 // pred_region
      _
    $region13: #{policy_net_continuous.1} parent=1 // pred_fallthru
      _
    // Predicated region
    $region14: #{policy_net_continuous.1} parent=1 // pred_check
      _
    $region15: #{policy_net_continuous.1} parent=1 // pred_check_branch
      %37 = sbr.rel (0) target = $region17
    $region16: #{policy_net_continuous.1} parent=1 // pred_region
      %s39 = ssub.s32 2048, 2048
      %40 = vsyncadd [#allocation5], %s39
      %s41 = sshll.u32 [#allocation6], 4
      %s42 = int_to_ptr.vmem [resolvable:$true] %s41
      %47 = dma.hbm_to_vmem [thread:$0]  %s3, 2048, %s42, [#allocation5], 128, 128, 8
    $region17: #{policy_net_continuous.1} parent=1 // pred_fallthru
      _
    // Predicated region
    $region18: #{policy_net_continuous.1} parent=1 // pred_check
      _
    $region19: #{policy_net_continuous.1} parent=1 // pred_check_branch
      %49 = sbr.rel (0) target = $region21
    $region20: #{policy_net_continuous.1} parent=1 // pred_region
      _
    $region21: #{policy_net_continuous.1} parent=1 // pred_fallthru
      _
    // Predicated region
    $region22: #{policy_net_continuous.1} parent=1 // pred_check
      _
    $region23: #{policy_net_continuous.1} parent=1 // pred_check_branch
      %51 = sbr.rel (0) target = $region25
    $region24: #{policy_net_continuous.1} parent=1 // pred_region
      %52 = dma.done [#allocation3], 128
    $region25: #{policy_net_continuous.1} parent=1 // pred_fallthru
      _
    // Predicated region
    $region26: #{policy_net_continuous.1} parent=1 // pred_check
      _
    $region27: #{policy_net_continuous.1} parent=1 // pred_check_branch
      %54 = sbr.rel (0) target = $region29
    $region28: #{policy_net_continuous.1} parent=1 // pred_region
      %55 = dma.done [#allocation5], 256
    $region29: #{policy_net_continuous.1} parent=1 // pred_fallthru
      _
    // Predicated region
    $region30: #{policy_net_continuous.1} parent=1 // pred_check
      _
    $region31: #{policy_net_continuous.1} parent=1 // pred_check_branch
      %57 = sbr.rel (0) target = $region33
    $region32: #{policy_net_continuous.1} parent=1 // pred_region
      %58 = dma.done [#allocation5], 2048
    $region33: #{policy_net_continuous.1} parent=1 // pred_fallthru
      _
    %v59 = vld [vmem:[#allocation2] sm:$0xff]
    %v60 = vld [vmem:[#allocation4] sm:$0xff]
    %v61 = vld [vmem:[#allocation4 + $0x8] sm:$0xff]
    %v62 = vld [vmem:[%s2] sm:$0x1]
    %v64 = vlaneseq
    %v65 = vshrl.u32 %v64, 7
    %v66 = vsub.s32 0, %v65
    %v67 = vrot.slane %v62, %v66
    %vm69 = vcmask 130048
    %v71 = vsel %vm69, %v59, 0
    %73 = vmatprep.subr.mxu0 0.0
    %74 = vmatpush1.msra.mxu0 %v60
    %75 = vmatprep.subr.mxu0 0.0
    %76 = vmatpush1.msra.mxu0 %v61
    %77 = vmatprep.subr.mxu0 0.0
    %78 = vmatpush1.msra.mxu0 0.0
    %79 = vmatprep.subr.mxu0 0.0
    %80 = vmatpush1.msra.mxu0 0.0
    %81 = vmatprep.subr.mxu0 0.0
    %82 = vmatpush1.msra.mxu0 0.0
    %83 = vmatprep.subr.mxu0 0.0
    %84 = vmatpush1.msra.mxu0 0.0
    %85 = vmatprep.subr.mxu0 0.0
    %86 = vmatpush1.msra.mxu0 0.0
    %87 = vmatprep.subr.mxu0 0.0
    %88 = vmatpush1.msra.mxu0 0.0
    %89 = vmatprep.subr.mxu0 0.0
    %90 = vmatpush1.msra.mxu0 0.0
    %91 = vmatprep.subr.mxu0 0.0
    %92 = vmatpush1.msra.mxu0 0.0
    %93 = vmatprep.subr.mxu0 0.0
    %94 = vmatpush1.msra.mxu0 0.0
    %95 = vmatprep.subr.mxu0 0.0
    %96 = vmatpush1.msra.mxu0 0.0
    %97 = vmatprep.subr.mxu0 0.0
    %98 = vmatpush1.msra.mxu0 0.0
    %99 = vmatprep.subr.mxu0 0.0
    %100 = vmatpush1.msra.mxu0 0.0
    %101 = vmatprep.subr.mxu0 0.0
    %102 = vmatpush1.msra.mxu0 0.0
    %103 = vmatprep.subr.mxu0 0.0
    %104 = vmatpush1.msra.mxu0 0.0
    %105 = vmatprep.subr.mxu0 0.0
    %106 = vmatpush1.msra.mxu0 0.0
    %107 = vmatprep.subr.mxu0 0.0
    %108 = vmatpush1.msra.mxu0 0.0
    %109 = vmatprep.subr.mxu0 0.0
    %110 = vmatpush1.msra.mxu0 0.0
    %111 = vmatprep.subr.mxu0 0.0
    %112 = vmatpush1.msra.mxu0 0.0
    %113 = vmatprep.subr.mxu0 0.0
    %114 = vmatpush1.msra.mxu0 0.0
    %115 = vmatprep.subr.mxu0 0.0
    %116 = vmatpush1.msra.mxu0 0.0
    %117 = vmatprep.subr.mxu0 0.0
    %118 = vmatpush1.msra.mxu0 0.0
    %119 = vmatprep.subr.mxu0 0.0
    %120 = vmatpush1.msra.mxu0 0.0
    %121 = vmatprep.subr.mxu0 0.0
    %122 = vmatpush1.msra.mxu0 0.0
    %123 = vmatprep.subr.mxu0 0.0
    %124 = vmatpush1.msra.mxu0 0.0
    %125 = vmatprep.subr.mxu0 0.0
    %126 = vmatpush1.msra.mxu0 0.0
    %127 = vmatprep.subr.mxu0 0.0
    %128 = vmatpush1.msra.mxu0 0.0
    %129 = vmatprep.subr.mxu0 0.0
    %130 = vmatpush1.msra.mxu0 0.0
    %131 = vmatprep.subr.mxu0 0.0
    %132 = vmatpush1.msra.mxu0 0.0
    %133 = vmatprep.subr.mxu0 0.0
    %134 = vmatpush1.msra.mxu0 0.0
    %135 = vmatprep.subr.mxu0 0.0
    %136 = vmatpush1.msra.mxu0 0.0
    %137 = vmatprep.mubr.f32.mxu0 0.0
    %138 = vmatmul.mubr.f32.gmra.mrb[0].mxu0 %v71
    %v139 = vpop.f32.mrb[0].mxu0
    %v140 = vadd.f32 %v67, %v139
    %v141 = vpop.f32.mrb[0].mxu0
    %142 = vdwg.mxu0
    %v143 = vmax.f32 %v140, 0.0
    %v144 = vld [vmem:[#allocation6] sm:$0xff]
    %v145 = vld [vmem:[#allocation6 + $0x8] sm:$0xff]
    %v146 = vld [vmem:[#allocation6 + $0x10] sm:$0xff]
    %v147 = vld [vmem:[#allocation6 + $0x18] sm:$0xff]
    %v148 = vld [vmem:[#allocation6 + $0x20] sm:$0xff]
    %v149 = vld [vmem:[#allocation6 + $0x28] sm:$0xff]
    %v150 = vld [vmem:[#allocation6 + $0x30] sm:$0xff]
    %v151 = vld [vmem:[#allocation6 + $0x38] sm:$0xff]
    %v152 = vld [vmem:[#allocation6 + $0x40] sm:$0xff]
    %v153 = vld [vmem:[#allocation6 + $0x48] sm:$0xff]
    %v154 = vld [vmem:[#allocation6 + $0x50] sm:$0xff]
    %v155 = vld [vmem:[#allocation6 + $0x58] sm:$0xff]
    %v156 = vld [vmem:[#allocation6 + $0x60] sm:$0xff]
    %v157 = vld [vmem:[#allocation6 + $0x68] sm:$0xff]
    %v158 = vld [vmem:[#allocation6 + $0x70] sm:$0xff]
    %v159 = vld [vmem:[#allocation6 + $0x78] sm:$0xff]
    %v160 = vld [vmem:[%s4] sm:$0x1]
    %v162 = vlaneseq
    %v163 = vshrl.u32 %v162, 7
    %v164 = vsub.s32 0, %v163
    %v165 = vrot.slane %v160, %v164
    %167 = vmatprep.subr.mxu0 0.0
    %168 = vmatpush1.msra.mxu0 %v144
    %169 = vmatprep.subr.mxu0 0.0
    %170 = vmatpush1.msra.mxu0 %v145
    %171 = vmatprep.subr.mxu0 0.0
    %172 = vmatpush1.msra.mxu0 %v146
    %173 = vmatprep.subr.mxu0 0.0
    %174 = vmatpush1.msra.mxu0 %v147
    %175 = vmatprep.subr.mxu0 0.0
    %176 = vmatpush1.msra.mxu0 %v148
    %177 = vmatprep.subr.mxu0 0.0
    %178 = vmatpush1.msra.mxu0 %v149
    %179 = vmatprep.subr.mxu0 0.0
    %180 = vmatpush1.msra.mxu0 %v150
    %181 = vmatprep.subr.mxu0 0.0
    %182 = vmatpush1.msra.mxu0 %v151
    %183 = vmatprep.subr.mxu0 0.0
    %184 = vmatpush1.msra.mxu0 %v152
    %185 = vmatprep.subr.mxu0 0.0
    %186 = vmatpush1.msra.mxu0 %v153
    %187 = vmatprep.subr.mxu0 0.0
    %188 = vmatpush1.msra.mxu0 %v154
    %189 = vmatprep.subr.mxu0 0.0
    %190 = vmatpush1.msra.mxu0 %v155
    %191 = vmatprep.subr.mxu0 0.0
    %192 = vmatpush1.msra.mxu0 %v156
    %193 = vmatprep.subr.mxu0 0.0
    %194 = vmatpush1.msra.mxu0 %v157
    %195 = vmatprep.subr.mxu0 0.0
    %196 = vmatpush1.msra.mxu0 %v158
    %197 = vmatprep.subr.mxu0 0.0
    %198 = vmatpush1.msra.mxu0 %v159
    %199 = vmatprep.subr.mxu0 0.0
    %200 = vmatpush1.msra.mxu0 0.0
    %201 = vmatprep.subr.mxu0 0.0
    %202 = vmatpush1.msra.mxu0 0.0
    %203 = vmatprep.subr.mxu0 0.0
    %204 = vmatpush1.msra.mxu0 0.0
    %205 = vmatprep.subr.mxu0 0.0
    %206 = vmatpush1.msra.mxu0 0.0
    %207 = vmatprep.subr.mxu0 0.0
    %208 = vmatpush1.msra.mxu0 0.0
    %209 = vmatprep.subr.mxu0 0.0
    %210 = vmatpush1.msra.mxu0 0.0
    %211 = vmatprep.subr.mxu0 0.0
    %212 = vmatpush1.msra.mxu0 0.0
    %213 = vmatprep.subr.mxu0 0.0
    %214 = vmatpush1.msra.mxu0 0.0
    %215 = vmatprep.subr.mxu0 0.0
    %216 = vmatpush1.msra.mxu0 0.0
    %217 = vmatprep.subr.mxu0 0.0
    %218 = vmatpush1.msra.mxu0 0.0
    %219 = vmatprep.subr.mxu0 0.0
    %220 = vmatpush1.msra.mxu0 0.0
    %221 = vmatprep.subr.mxu0 0.0
    %222 = vmatpush1.msra.mxu0 0.0
    %223 = vmatprep.subr.mxu0 0.0
    %224 = vmatpush1.msra.mxu0 0.0
    %225 = vmatprep.subr.mxu0 0.0
    %226 = vmatpush1.msra.mxu0 0.0
    %227 = vmatprep.subr.mxu0 0.0
    %228 = vmatpush1.msra.mxu0 0.0
    %229 = vmatprep.subr.mxu0 0.0
    %230 = vmatpush1.msra.mxu0 0.0
    %231 = vmatprep.mubr.f32.mxu0 0.0
    %232 = vmatmul.mubr.f32.gmra.mrb[0].mxu0 %v143
    %v233 = vpop.f32.mrb[0].mxu0
    %v234 = vadd.f32 %v165, %v233
    %v235 = vpop.f32.mrb[0].mxu0
    %236 = vdwg.mxu0
    %v237 = vlaneseq
    %v238 = vand.u32 %v237, 127
    %vm239 = vcmp.ge.s32.totalorder %v238, 4
    %vm240 = vcmp.lt.s32.totalorder %v238, 8
    %vm241 = vmand %vm239, %vm240
    %vm242 = vcmp.gt.f32.partialorder %v234, 20.0
    %v243 = vmin.f32 %v234, 20.0
    %v244 = vmul.f32 %v243, 1.442695
    %v245 = vpow.pop %v244
    %v246 = vadd.f32 %v245, 1.0
    %v247 = vlog2.pop %v246
    %v248 = vmul.f32 %v247, 0.6931472
    %v249 = vmul.f32 -0.5, %v245
    %v250 = vadd.f32 %v249, 1.0
    %v251 = vmul.f32 %v250, %v245
    %v252 = vand.u32 2147483647, %v245
    %vm253 = vcmp.lt.f32.partialorder %v252, 0.0004427343
    %v254 = vsel %vm253, %v251, %v248
    %v255 = vsel %vm242, %v234, %v254
    %v256 = vsel %vm241, %v255, %v234
    %257 = vst [vmem:[%s5] sm:$0xff] %v256
    // Predicated region
    $region34: #{policy_net_continuous.1} parent=1 // pred_check
      _
    $region35: #{policy_net_continuous.1} parent=1 // pred_check_branch
      %259 = sbr.rel (0) target = $region37
    $region36: #{policy_net_continuous.1} parent=1 // pred_region
      _
    $region37: #{policy_net_continuous.1} parent=1 // pred_fallthru
      _
    // Predicated region
    $region38: #{policy_net_continuous.1} parent=1 // pred_check
      _
    $region39: #{policy_net_continuous.1} parent=1 // pred_check_branch
      %261 = sbr.rel (0) target = $region41
    $region40: #{policy_net_continuous.1} parent=1 // pred_region
      _
    $region41: #{policy_net_continuous.1} parent=1 // pred_fallthru
      _
    %262 = vsyncpa [#allocation3], 1
    %263 = vsyncpa [#allocation5], 1

</llo_original>
